<compile_context>
chip_gen: v7x
topology: tpu7x:2x2x1
jax: 0.10.0
libtpu: 0.0.40
codegen_flags: <defaults>
</compile_context>

<pallas_src>
import jax
import jax.numpy as jnp
from jax.experimental import pallas as pl
from jax.experimental.pallas import tpu as pltpu

# Hyperparameters implied by the module (n_cols / n_cats are free; pick small).
N_COLS = 64
N_CATS = 16
N_CATS_PAD = 128          # class axis padded to one full lane width
H1, H2, H3 = 512, 256, 32
NEG_PAD = -1e30           # bias for padded (fake) classes -> exp() == 0.0


def mlp_kernel(x_ref, w1_ref, b1_ref, w2_ref, b2_ref, w3_ref, b3_ref,
               w4_ref, b4_ref, o_ref):
    """Whole MLP + log_softmax for one batch tile, entirely in VMEM.

    Weights are bf16 and activations are kept in bf16 between layers; the
    MXU accumulates in f32 and bias/relu/log_softmax run in f32.
    """
    def lin(h_bf16, w_ref, b_ref):
        return jnp.dot(h_bf16, w_ref[...],
                       preferred_element_type=jnp.float32) + b_ref[...]

    h = x_ref[...].astype(jnp.bfloat16)
    h = jnp.maximum(lin(h, w1_ref, b1_ref), 0.0).astype(jnp.bfloat16)  # fc1+relu
    h = jnp.maximum(lin(h, w2_ref, b2_ref), 0.0).astype(jnp.bfloat16)  # fc2+relu (+dp=id)
    h = jnp.maximum(lin(h, w3_ref, b3_ref), 0.0).astype(jnp.bfloat16)  # fc3+relu (+dp=id)
    logits = lin(h, w4_ref, b4_ref)                                    # fc4 (padded to 128)

    # log_softmax over the class axis. Padded columns have logits ~ -1e30,
    # so exp() underflows to exactly 0 and the real-class result is unchanged.
    m = jnp.max(logits, axis=-1, keepdims=True)
    s = logits - m
    lse = jnp.log(jnp.sum(jnp.exp(s), axis=-1, keepdims=True))
    o_ref[...] = (s - lse).astype(o_ref.dtype)


def _pick_tile_b(batch):
    """Batch tile: full extent for tiny batches; otherwise a multiple of 8
    capped at 2048, aiming for >= 2 grid tiles (v7x has 2 TensorCores)."""
    if batch <= 8:
        return batch                       # single full-extent block
    half = (((batch + 1) // 2) + 7) // 8 * 8
    return max(8, min(2048, half))


@jax.jit
def net_forward(x, params):
    B = x.shape[0]
    (w1, b1), (w2, b2), (w3, b3), (w4, b4) = params

    tile_b = _pick_tile_b(B)
    n_tiles = pl.cdiv(B, tile_b)           # ragged last block handled by Pallas

    def x_map(i):
        return (i, 0)

    def w_map(i):           # constant block index -> weights stay VMEM-resident
        return (0, 0)

    weight_bytes = sum(int(a.size) * a.dtype.itemsize
                       for a in (w1, b1, w2, b2, w3, b3, w4, b4))
    cost = pl.CostEstimate(
        flops=2 * B * (N_COLS * H1 + H1 * H2 + H2 * H3 + H3 * N_CATS_PAD),
        transcendentals=B * (N_CATS_PAD + 1),
        bytes_accessed=B * N_COLS * 4 + weight_bytes + B * N_CATS_PAD * 4,
    )

    out = pl.pallas_call(
        mlp_kernel,
        out_shape=jax.ShapeDtypeStruct((B, N_CATS_PAD), jnp.float32),
        grid_spec=pltpu.PrefetchScalarGridSpec(
            num_scalar_prefetch=0,
            grid=(n_tiles,),
            in_specs=[
                pl.BlockSpec((tile_b, N_COLS), x_map),
                pl.BlockSpec((N_COLS, H1), w_map),
                pl.BlockSpec((1, H1), w_map),
                pl.BlockSpec((H1, H2), w_map),
                pl.BlockSpec((1, H2), w_map),
                pl.BlockSpec((H2, H3), w_map),
                pl.BlockSpec((1, H3), w_map),
                pl.BlockSpec((H3, N_CATS_PAD), w_map),
                pl.BlockSpec((1, N_CATS_PAD), w_map),
            ],
            out_specs=pl.BlockSpec((tile_b, N_CATS_PAD), x_map),
        ),
        compiler_params=pltpu.CompilerParams(
            dimension_semantics=("parallel",),
            vmem_limit_bytes=32 * 1024 * 1024,   # > v5e's 16 MiB scoped default
        ),
        cost_estimate=cost,
    )(x, w1, b1, w2, b2, w3, b3, w4, b4)

    # Drop only the padded (fake) class columns; out-of-bounds rows of the
    # ragged last batch block were masked on write, so no row slicing needed.
    return out[:, :N_CATS]


def init_linear(key, fan_in, fan_out, pad_out_to=None):
    """PyTorch nn.Linear default init: U(-1/sqrt(fan_in), 1/sqrt(fan_in)).

    Weights stored [in, out] (transposed from PyTorch's [out, in]) in bf16;
    biases stay f32 (added to the f32 MXU accumulator).
    """
    kw, kb = jax.random.split(key)
    bound = float(fan_in) ** -0.5
    w = jax.random.uniform(kw, (fan_in, fan_out), jnp.float32, -bound, bound)
    b = jax.random.uniform(kb, (1, fan_out), jnp.float32, -bound, bound)
    if pad_out_to is not None and pad_out_to > fan_out:
        pad = pad_out_to - fan_out
        w = jnp.pad(w, ((0, 0), (0, pad)))                           # 0 weights
        b = jnp.pad(b, ((0, 0), (0, pad)), constant_values=NEG_PAD)  # -inf-ish
    return w.astype(jnp.bfloat16), b


def reference_forward(x, params):
    """Pure-JAX reference using the same bf16-weight / bf16-activation /
    f32-accumulate math as the kernel."""
    (w1, b1), (w2, b2), (w3, b3), (w4, b4) = params

    def lin(h_bf16, w, b):
        return jnp.dot(h_bf16, w, preferred_element_type=jnp.float32) + b

    h = x.astype(jnp.bfloat16)
    h = jnp.maximum(lin(h, w1, b1), 0.0).astype(jnp.bfloat16)
    h = jnp.maximum(lin(h, w2, b2), 0.0).astype(jnp.bfloat16)
    h = jnp.maximum(lin(h, w3, b3), 0.0).astype(jnp.bfloat16)
    logits = lin(h, w4[:, :N_CATS], b4[:, :N_CATS])
    return jax.nn.log_softmax(logits, axis=1)


if __name__ == "__main__":
    key = jax.random.PRNGKey(0)
    k_x, k1, k2, k3, k4 = jax.random.split(key, 5)

    # B=60 is deliberately not a multiple of the 32-row tile the picker
    # selects here -> exercises the ragged-last-block path (no wrapper pad)
    # with a grid of 2 (megacore-friendly).
    B = 60
    x = jax.random.normal(k_x, (B, N_COLS), jnp.float32)

    params = (
        init_linear(k1, N_COLS, H1),
        init_linear(k2, H1, H2),
        init_linear(k3, H2, H3),
        init_linear(k4, H3, N_CATS, pad_out_to=N_CATS_PAD),
    )

    out = jax.block_until_ready(net_forward(x, params))
    ref = reference_forward(x, params)

    assert out.shape == (B, N_CATS), out.shape
    assert jnp.allclose(out, ref, atol=1e-4, rtol=1e-4), "mismatch vs reference"

    print("KERNEL_OK")
</pallas_src>

<mosaic_0001>
module attributes {stable_mosaic.version = 11 : i64} {
  func.func @mlp_kernel(%arg0: i32, %arg1: memref<32x64xf32, #tpu.memory_space<vmem>>, %arg2: memref<64x512xbf16, #tpu.memory_space<vmem>>, %arg3: memref<1x512xf32, #tpu.memory_space<vmem>>, %arg4: memref<512x256xbf16, #tpu.memory_space<vmem>>, %arg5: memref<1x256xf32, #tpu.memory_space<vmem>>, %arg6: memref<256x32xbf16, #tpu.memory_space<vmem>>, %arg7: memref<1x32xf32, #tpu.memory_space<vmem>>, %arg8: memref<32x128xbf16, #tpu.memory_space<vmem>>, %arg9: memref<1x128xf32, #tpu.memory_space<vmem>>, %arg10: memref<32x128xf32, #tpu.memory_space<vmem>>) attributes {dimension_semantics = [#tpu.dimension_semantics<parallel>], iteration_bounds = array<i64: 2>, scalar_prefetch = 0 : i64, scratch_operands = 0 : i64, tpu.core_type = #tpu.core_type<tc>, window_params = [{transform_indices = @transform_0, window_bounds = array<i64: 32, 64>}, {pipeline_mode = #tpu.pipeline_mode<synchronous>, transform_indices = @transform_1, window_bounds = array<i64: 64, 512>}, {pipeline_mode = #tpu.pipeline_mode<synchronous>, transform_indices = @transform_2, window_bounds = array<i64: 1, 512>}, {pipeline_mode = #tpu.pipeline_mode<synchronous>, transform_indices = @transform_3, window_bounds = array<i64: 512, 256>}, {pipeline_mode = #tpu.pipeline_mode<synchronous>, transform_indices = @transform_4, window_bounds = array<i64: 1, 256>}, {pipeline_mode = #tpu.pipeline_mode<synchronous>, transform_indices = @transform_5, window_bounds = array<i64: 256, 32>}, {pipeline_mode = #tpu.pipeline_mode<synchronous>, transform_indices = @transform_6, window_bounds = array<i64: 1, 32>}, {pipeline_mode = #tpu.pipeline_mode<synchronous>, transform_indices = @transform_7, window_bounds = array<i64: 32, 128>}, {pipeline_mode = #tpu.pipeline_mode<synchronous>, transform_indices = @transform_8, window_bounds = array<i64: 1, 128>}, {transform_indices = @transform_9, window_bounds = array<i64: 32, 128>}]} {
    %c0 = arith.constant 0 : index
    %c0_0 = arith.constant 0 : index
    %0 = vector.load %arg1[%c0, %c0_0] : memref<32x64xf32, #tpu.memory_space<vmem>>, vector<32x64xf32>
    %1 = arith.truncf %0 : vector<32x64xf32> to vector<32x64xbf16>
    %c0_1 = arith.constant 0 : index
    %c0_2 = arith.constant 0 : index
    %2 = vector.load %arg2[%c0_1, %c0_2] : memref<64x512xbf16, #tpu.memory_space<vmem>>, vector<64x512xbf16>
    %cst = arith.constant dense<0.000000e+00> : vector<32x512xf32>
    %3 = tpu.matmul %1, %2, %cst {dimension_numbers = #tpu.dot_dimension_numbers<[1], [0], [0], [1], [0, 0, 1, 1], [], []>} : vector<32x64xbf16>, vector<64x512xbf16>, vector<32x512xf32> -> vector<32x512xf32>
    %c0_3 = arith.constant 0 : index
    %c0_4 = arith.constant 0 : index
    %4 = vector.load %arg3[%c0_3, %c0_4] : memref<1x512xf32, #tpu.memory_space<vmem>>, vector<1x512xf32>
    %5 = vector.broadcast %4 : vector<1x512xf32> to vector<32x512xf32>
    %6 = arith.addf %3, %5 : vector<32x512xf32>
    %cst_5 = arith.constant 0.000000e+00 : f32
    %7 = vector.broadcast %cst_5 : f32 to vector<32x512xf32>
    %8 = arith.maximumf %6, %7 : vector<32x512xf32>
    %9 = arith.truncf %8 : vector<32x512xf32> to vector<32x512xbf16>
    %c0_6 = arith.constant 0 : index
    %c0_7 = arith.constant 0 : index
    %10 = vector.load %arg4[%c0_6, %c0_7] : memref<512x256xbf16, #tpu.memory_space<vmem>>, vector<512x256xbf16>
    %cst_8 = arith.constant dense<0.000000e+00> : vector<32x256xf32>
    %11 = tpu.matmul %9, %10, %cst_8 {dimension_numbers = #tpu.dot_dimension_numbers<[1], [0], [0], [1], [0, 0, 1, 1], [], []>} : vector<32x512xbf16>, vector<512x256xbf16>, vector<32x256xf32> -> vector<32x256xf32>
    %c0_9 = arith.constant 0 : index
    %c0_10 = arith.constant 0 : index
    %12 = vector.load %arg5[%c0_9, %c0_10] : memref<1x256xf32, #tpu.memory_space<vmem>>, vector<1x256xf32>
    %13 = vector.broadcast %12 : vector<1x256xf32> to vector<32x256xf32>
    %14 = arith.addf %11, %13 : vector<32x256xf32>
    %cst_11 = arith.constant 0.000000e+00 : f32
    %15 = vector.broadcast %cst_11 : f32 to vector<32x256xf32>
    %16 = arith.maximumf %14, %15 : vector<32x256xf32>
    %17 = arith.truncf %16 : vector<32x256xf32> to vector<32x256xbf16>
    %c0_12 = arith.constant 0 : index
    %c0_13 = arith.constant 0 : index
    %18 = vector.load %arg6[%c0_12, %c0_13] : memref<256x32xbf16, #tpu.memory_space<vmem>>, vector<256x32xbf16>
    %cst_14 = arith.constant dense<0.000000e+00> : vector<32x32xf32>
    %19 = tpu.matmul %17, %18, %cst_14 {dimension_numbers = #tpu.dot_dimension_numbers<[1], [0], [0], [1], [0, 0, 1, 1], [], []>} : vector<32x256xbf16>, vector<256x32xbf16>, vector<32x32xf32> -> vector<32x32xf32>
    %c0_15 = arith.constant 0 : index
    %c0_16 = arith.constant 0 : index
    %20 = vector.load %arg7[%c0_15, %c0_16] : memref<1x32xf32, #tpu.memory_space<vmem>>, vector<1x32xf32>
    %21 = vector.broadcast %20 : vector<1x32xf32> to vector<32x32xf32>
    %22 = arith.addf %19, %21 : vector<32x32xf32>
    %cst_17 = arith.constant 0.000000e+00 : f32
    %23 = vector.broadcast %cst_17 : f32 to vector<32x32xf32>
    %24 = arith.maximumf %22, %23 : vector<32x32xf32>
    %25 = arith.truncf %24 : vector<32x32xf32> to vector<32x32xbf16>
    %c0_18 = arith.constant 0 : index
    %c0_19 = arith.constant 0 : index
    %26 = vector.load %arg8[%c0_18, %c0_19] : memref<32x128xbf16, #tpu.memory_space<vmem>>, vector<32x128xbf16>
    %cst_20 = arith.constant dense<0.000000e+00> : vector<32x128xf32>
    %27 = tpu.matmul %25, %26, %cst_20 {dimension_numbers = #tpu.dot_dimension_numbers<[1], [0], [0], [1], [0, 0, 1, 1], [], []>} : vector<32x32xbf16>, vector<32x128xbf16>, vector<32x128xf32> -> vector<32x128xf32>
    %c0_21 = arith.constant 0 : index
    %c0_22 = arith.constant 0 : index
    %28 = vector.load %arg9[%c0_21, %c0_22] : memref<1x128xf32, #tpu.memory_space<vmem>>, vector<1x128xf32>
    %29 = vector.broadcast %28 : vector<1x128xf32> to vector<32x128xf32>
    %30 = arith.addf %27, %29 : vector<32x128xf32>
    %cst_23 = arith.constant dense<0xFF800000> : vector<32xf32>
    %31 = vector.multi_reduction <maximumf>, %30, %cst_23 [1] : vector<32x128xf32> to vector<32xf32>
    %32 = vector.shape_cast %31 : vector<32xf32> to vector<32x1xf32>
    %33 = vector.broadcast %32 : vector<32x1xf32> to vector<32x128xf32>
    %34 = arith.subf %30, %33 : vector<32x128xf32>
    %35 = math.exp %34 : vector<32x128xf32>
    %cst_24 = arith.constant dense<0.000000e+00> : vector<32xf32>
    %36 = vector.multi_reduction <add>, %35, %cst_24 [1] : vector<32x128xf32> to vector<32xf32>
    %37 = vector.shape_cast %36 : vector<32xf32> to vector<32x1xf32>
    %38 = math.log %37 : vector<32x1xf32>
    %39 = vector.broadcast %38 : vector<32x1xf32> to vector<32x128xf32>
    %40 = arith.subf %34, %39 : vector<32x128xf32>
    %c0_25 = arith.constant 0 : index
    %c0_26 = arith.constant 0 : index
    %41 = vector.load %arg10[%c0_25, %c0_26] : memref<32x128xf32, #tpu.memory_space<vmem>>, vector<32x128xf32>
    tpu.vector_store %arg10[%c0_25, %c0_26], %40 {strides = array<i32>} : memref<32x128xf32, #tpu.memory_space<vmem>>, vector<32x128xf32>,
    return
  }
  func.func @transform_0(%arg0: i32) -> (i32, i32) {
    %c0_i32 = arith.constant 0 : i32
    %c0_i32_0 = arith.constant 0 : i32
    return %arg0, %c0_i32 : i32, i32
  }
  func.func @transform_1(%arg0: i32) -> (i32, i32) {
    %c0_i32 = arith.constant 0 : i32
    %c0_i32_0 = arith.constant 0 : i32
    %c0_i32_1 = arith.constant 0 : i32
    return %c0_i32, %c0_i32_0 : i32, i32
  }
  func.func @transform_2(%arg0: i32) -> (i32, i32) {
    %c0_i32 = arith.constant 0 : i32
    %c0_i32_0 = arith.constant 0 : i32
    %c0_i32_1 = arith.constant 0 : i32
    return %c0_i32, %c0_i32_0 : i32, i32
  }
  func.func @transform_3(%arg0: i32) -> (i32, i32) {
    %c0_i32 = arith.constant 0 : i32
    %c0_i32_0 = arith.constant 0 : i32
    %c0_i32_1 = arith.constant 0 : i32
    return %c0_i32, %c0_i32_0 : i32, i32
  }
  func.func @transform_4(%arg0: i32) -> (i32, i32) {
    %c0_i32 = arith.constant 0 : i32
    %c0_i32_0 = arith.constant 0 : i32
    %c0_i32_1 = arith.constant 0 : i32
    return %c0_i32, %c0_i32_0 : i32, i32
  }
  func.func @transform_5(%arg0: i32) -> (i32, i32) {
    %c0_i32 = arith.constant 0 : i32
    %c0_i32_0 = arith.constant 0 : i32
    %c0_i32_1 = arith.constant 0 : i32
    return %c0_i32, %c0_i32_0 : i32, i32
  }
  func.func @transform_6(%arg0: i32) -> (i32, i32) {
    %c0_i32 = arith.constant 0 : i32
    %c0_i32_0 = arith.constant 0 : i32
    %c0_i32_1 = arith.constant 0 : i32
    return %c0_i32, %c0_i32_0 : i32, i32
  }
  func.func @transform_7(%arg0: i32) -> (i32, i32) {
    %c0_i32 = arith.constant 0 : i32
    %c0_i32_0 = arith.constant 0 : i32
    %c0_i32_1 = arith.constant 0 : i32
    return %c0_i32, %c0_i32_0 : i32, i32
  }
  func.func @transform_8(%arg0: i32) -> (i32, i32) {
    %c0_i32 = arith.constant 0 : i32
    %c0_i32_0 = arith.constant 0 : i32
    %c0_i32_1 = arith.constant 0 : i32
    return %c0_i32, %c0_i32_0 : i32, i32
  }
  func.func @transform_9(%arg0: i32) -> (i32, i32) {
    %c0_i32 = arith.constant 0 : i32
    %c0_i32_0 = arith.constant 0 : i32
    return %arg0, %c0_i32 : i32, i32
  }
}

</mosaic_0001>

<llo_original>
// kernel: net_forward.1
$region0: #{net_forward.1}
  #allocation0 [shape = 'u32[]', space=smem, size = 0x4, offset = 0x4, fixed_abs, tag = 'smem constant byte address 0x4 - core index']
  #allocation1 [shape = 'u32[144,128]{1,0:T(1,128)}', space=vmem, size = 0x12000, scoped, tag = 'internal scratch']
  %s0 = inlined_call_operand.hbm [shape: f32[60,64], index: 0, kind: input, shape index: {}]
  %s1 = inlined_call_operand.vmem [shape: bf16[64,512], index: 1, kind: input, shape index: {}]
  %s2 = inlined_call_operand.vmem [shape: f32[1,512], index: 2, kind: input, shape index: {}]
  %s3 = inlined_call_operand.hbm [shape: bf16[512,256], index: 3, kind: input, shape index: {}]
  %s4 = inlined_call_operand.vmem [shape: f32[1,256], index: 4, kind: input, shape index: {}]
  %s5 = inlined_call_operand.vmem [shape: bf16[256,32], index: 5, kind: input, shape index: {}]
  %s6 = inlined_call_operand.vmem [shape: f32[1,32], index: 6, kind: input, shape index: {}]
  %s7 = inlined_call_operand.vmem [shape: bf16[32,128], index: 7, kind: input, shape index: {}]
  %s8 = inlined_call_operand.vmem [shape: f32[1,128], index: 8, kind: input, shape index: {}]
  %s9 = inlined_call_operand.vmem [shape: f32[60,128], index: 9, kind: output, shape index: {}]
  %s10 = sld [smem:[#allocation0]]
  $region77: #{net_forward.1} parent=0
    _
  %s12 = ssub.s32 1, %s10
  %s13 = scalar_select 0, %s12, %s10
  $region1: #{net_forward.1} parent=0
    #allocation2 [shape = 'u8[32768]{0}', space=vmem, size = 0x8000, scoped, tag = 'input window, operand 0']
    #allocation3 [shape = 's32[2]{0}', space=sflag, size = 0x8, scoped, tag = 'scoped memory for net_forward.1']
    #allocation4 [shape = 'u8[262144]{0}', space=vmem, size = 0x40000, scoped, tag = 'input window, operand 3, single buffered']
    #allocation5 [shape = 's32[1]{0}', space=sflag, size = 0x4, scoped, tag = 'scoped memory for net_forward.1']
    %14 = vsyncpa [#allocation3], 0
    %s15 = scalar_lea.sflag [#allocation3], 1
    %16 = vsyncpa %s15, 0
    %17 = vsyncpa [#allocation5], 0
    loop: start=0, step=1, limit=4
    $region2: #{net_forward.1} parent=1 // loop_pre_header
      _
    $region3: #{net_forward.1} parent=1 // loop_header
      %s19 = sphi 0, %s23
      %p20 = scmp.ge.s32.totalorder %s19, 4
      %s29 = sphi 0, %s31
      %s32 = sphi 0, %s29
      %s33 = sphi 0, %s32
      %s49 = sphi 0, %s33
      %s53 = sphi 0, %s53
      %s55 = sphi 0, %s53
      %s56 = sphi 0, %s55
      %s70 = sphi 0, %s56
      %s74 = sphi 0, %s74
      %s76 = sphi 0, %s74
      %s77 = sphi 0, %s76
      %s91 = sphi 0, %s77
      %s95 = sphi 0, %s95
      %s97 = sphi 0, %s95
      %s98 = sphi 0, %s97
      %s112 = sphi 0, %s98
      %s116 = sphi 0, %s116
      %s118 = sphi 0, %s116
      %s119 = sphi 0, %s118
      %s133 = sphi 0, %s119
      %s137 = sphi 0, %s137
      %s139 = sphi 0, %s137
      %s140 = sphi 0, %s139
      %s154 = sphi 0, %s140
      %s158 = sphi 0, %s158
      %s160 = sphi 0, %s158
      %s161 = sphi 0, %s160
      %s175 = sphi 0, %s161
      %s179 = sphi 0, %s179
      %s181 = sphi 0, %s179
      %s182 = sphi 0, %s181
      %s196 = sphi 0, %s182
      %s200 = sphi 0, %s200
      %s202 = sphi 0, %s200
      %s203 = sphi 0, %s202
      %s217 = sphi 0, %s203
      %s223 = sphi 0, %s225
      %s226 = sphi 0, %s223
      %s227 = sphi 0, %s226
      %s243 = sphi 0, %s227
    $region4: #{net_forward.1} parent=1 // loop_header_branch
      %22 = sbr.rel (%p20) target = $region8
    $region5: #{net_forward.1} parent=1 // loop_body
      %s24 = ssub.s32 %s19, 1
      %s25 = ssub.s32 %s19, 2
      %s26 = sadd.s32 %s19, 1
      %s27 = ssub.s32 %s19, %s26
      %p28 = scmp.eq.s32.totalorder %s27, 0
      %s30 = sadd.s32 %s29, 1
      %s31 = scalar_select %p28, %s29, %s30
      %p34 = pneg %p28
      %p35 = scmp.eq.s32.totalorder %s19, 1
      %p36 = por %p34, %p35
      %p37 = scmp.ne.s32.totalorder %s29, %s32
      %p38 = scmp.eq.s32.totalorder %s19, 0
      %p39 = por %p37, %p38
      %p40 = scmp.ne.s32.totalorder %s29, %s32
      %p41 = scmp.eq.s32.totalorder %s24, 1
      %p42 = por %p40, %p41
      %p43 = scmp.ne.s32.totalorder %s32, %s33
      %p44 = scmp.eq.s32.totalorder %s24, 0
      %p45 = por %p43, %p44
      %p46 = scmp.ne.s32.totalorder %s32, %s33
      %p47 = scmp.eq.s32.totalorder %s25, 1
      %p48 = por %p46, %p47
      %p50 = scmp.ne.s32.totalorder %s33, %s49
      %p51 = scmp.eq.s32.totalorder %s25, 0
      %p52 = por %p50, %p51
      %s54 = sadd.s32 %s53, 1
      %p57 = scmp.eq.s32.totalorder %s19, 1
      %p58 = scmp.ne.s32.totalorder %s53, %s55
      %p59 = scmp.eq.s32.totalorder %s19, 0
      %p60 = por %p58, %p59
      %p61 = scmp.ne.s32.totalorder %s53, %s55
      %p62 = scmp.eq.s32.totalorder %s24, 1
      %p63 = por %p61, %p62
      %p64 = scmp.ne.s32.totalorder %s55, %s56
      %p65 = scmp.eq.s32.totalorder %s24, 0
      %p66 = por %p64, %p65
      %p67 = scmp.ne.s32.totalorder %s55, %s56
      %p68 = scmp.eq.s32.totalorder %s25, 1
      %p69 = por %p67, %p68
      %p71 = scmp.ne.s32.totalorder %s56, %s70
      %p72 = scmp.eq.s32.totalorder %s25, 0
      %p73 = por %p71, %p72
      %s75 = sadd.s32 %s74, 1
      %p78 = scmp.eq.s32.totalorder %s19, 1
      %p79 = scmp.ne.s32.totalorder %s74, %s76
      %p80 = scmp.eq.s32.totalorder %s19, 0
      %p81 = por %p79, %p80
      %p82 = scmp.ne.s32.totalorder %s74, %s76
      %p83 = scmp.eq.s32.totalorder %s24, 1
      %p84 = por %p82, %p83
      %p85 = scmp.ne.s32.totalorder %s76, %s77
      %p86 = scmp.eq.s32.totalorder %s24, 0
      %p87 = por %p85, %p86
      %p88 = scmp.ne.s32.totalorder %s76, %s77
      %p89 = scmp.eq.s32.totalorder %s25, 1
      %p90 = por %p88, %p89
      %p92 = scmp.ne.s32.totalorder %s77, %s91
      %p93 = scmp.eq.s32.totalorder %s25, 0
      %p94 = por %p92, %p93
      %s96 = sadd.s32 %s95, 1
      %p99 = scmp.eq.s32.totalorder %s19, 1
      %p100 = scmp.ne.s32.totalorder %s95, %s97
      %p101 = scmp.eq.s32.totalorder %s19, 0
      %p102 = por %p100, %p101
      %p103 = scmp.ne.s32.totalorder %s95, %s97
      %p104 = scmp.eq.s32.totalorder %s24, 1
      %p105 = por %p103, %p104
      %p106 = scmp.ne.s32.totalorder %s97, %s98
      %p107 = scmp.eq.s32.totalorder %s24, 0
      %p108 = por %p106, %p107
      %p109 = scmp.ne.s32.totalorder %s97, %s98
      %p110 = scmp.eq.s32.totalorder %s25, 1
      %p111 = por %p109, %p110
      %p113 = scmp.ne.s32.totalorder %s98, %s112
      %p114 = scmp.eq.s32.totalorder %s25, 0
      %p115 = por %p113, %p114
      %s117 = sadd.s32 %s116, 1
      %p120 = scmp.eq.s32.totalorder %s19, 1
      %p121 = scmp.ne.s32.totalorder %s116, %s118
      %p122 = scmp.eq.s32.totalorder %s19, 0
      %p123 = por %p121, %p122
      %p124 = scmp.ne.s32.totalorder %s116, %s118
      %p125 = scmp.eq.s32.totalorder %s24, 1
      %p126 = por %p124, %p125
      %p127 = scmp.ne.s32.totalorder %s118, %s119
      %p128 = scmp.eq.s32.totalorder %s24, 0
      %p129 = por %p127, %p128
      %p130 = scmp.ne.s32.totalorder %s118, %s119
      %p131 = scmp.eq.s32.totalorder %s25, 1
      %p132 = por %p130, %p131
      %p134 = scmp.ne.s32.totalorder %s119, %s133
      %p135 = scmp.eq.s32.totalorder %s25, 0
      %p136 = por %p134, %p135
      %s138 = sadd.s32 %s137, 1
      %p141 = scmp.eq.s32.totalorder %s19, 1
      %p142 = scmp.ne.s32.totalorder %s137, %s139
      %p143 = scmp.eq.s32.totalorder %s19, 0
      %p144 = por %p142, %p143
      %p145 = scmp.ne.s32.totalorder %s137, %s139
      %p146 = scmp.eq.s32.totalorder %s24, 1
      %p147 = por %p145, %p146
      %p148 = scmp.ne.s32.totalorder %s139, %s140
      %p149 = scmp.eq.s32.totalorder %s24, 0
      %p150 = por %p148, %p149
      %p151 = scmp.ne.s32.totalorder %s139, %s140
      %p152 = scmp.eq.s32.totalorder %s25, 1
      %p153 = por %p151, %p152
      %p155 = scmp.ne.s32.totalorder %s140, %s154
      %p156 = scmp.eq.s32.totalorder %s25, 0
      %p157 = por %p155, %p156
      %s159 = sadd.s32 %s158, 1
      %p162 = scmp.eq.s32.totalorder %s19, 1
      %p163 = scmp.ne.s32.totalorder %s158, %s160
      %p164 = scmp.eq.s32.totalorder %s19, 0
      %p165 = por %p163, %p164
      %p166 = scmp.ne.s32.totalorder %s158, %s160
      %p167 = scmp.eq.s32.totalorder %s24, 1
      %p168 = por %p166, %p167
      %p169 = scmp.ne.s32.totalorder %s160, %s161
      %p170 = scmp.eq.s32.totalorder %s24, 0
      %p171 = por %p169, %p170
      %p172 = scmp.ne.s32.totalorder %s160, %s161
      %p173 = scmp.eq.s32.totalorder %s25, 1
      %p174 = por %p172, %p173
      %p176 = scmp.ne.s32.totalorder %s161, %s175
      %p177 = scmp.eq.s32.totalorder %s25, 0
      %p178 = por %p176, %p177
      %s180 = sadd.s32 %s179, 1
      %p183 = scmp.eq.s32.totalorder %s19, 1
      %p184 = scmp.ne.s32.totalorder %s179, %s181
      %p185 = scmp.eq.s32.totalorder %s19, 0
      %p186 = por %p184, %p185
      %p187 = scmp.ne.s32.totalorder %s179, %s181
      %p188 = scmp.eq.s32.totalorder %s24, 1
      %p189 = por %p187, %p188
      %p190 = scmp.ne.s32.totalorder %s181, %s182
      %p191 = scmp.eq.s32.totalorder %s24, 0
      %p192 = por %p190, %p191
      %p193 = scmp.ne.s32.totalorder %s181, %s182
      %p194 = scmp.eq.s32.totalorder %s25, 1
      %p195 = por %p193, %p194
      %p197 = scmp.ne.s32.totalorder %s182, %s196
      %p198 = scmp.eq.s32.totalorder %s25, 0
      %p199 = por %p197, %p198
      %s201 = sadd.s32 %s200, 1
      %p204 = scmp.eq.s32.totalorder %s19, 1
      %p205 = scmp.ne.s32.totalorder %s200, %s202
      %p206 = scmp.eq.s32.totalorder %s19, 0
      %p207 = por %p205, %p206
      %p208 = scmp.ne.s32.totalorder %s200, %s202
      %p209 = scmp.eq.s32.totalorder %s24, 1
      %p210 = por %p208, %p209
      %p211 = scmp.ne.s32.totalorder %s202, %s203
      %p212 = scmp.eq.s32.totalorder %s24, 0
      %p213 = por %p211, %p212
      %p214 = scmp.ne.s32.totalorder %s202, %s203
      %p215 = scmp.eq.s32.totalorder %s25, 1
      %p216 = por %p214, %p215
      %p218 = scmp.ne.s32.totalorder %s203, %s217
      %p219 = scmp.eq.s32.totalorder %s25, 0
      %p220 = por %p218, %p219
      %s221 = ssub.s32 %s19, %s26
      %p222 = scmp.eq.s32.totalorder %s221, 0
      %s224 = sadd.s32 %s223, 1
      %s225 = scalar_select %p222, %s223, %s224
      %p228 = pneg %p222
      %p229 = scmp.eq.s32.totalorder %s19, 1
      %p230 = por %p228, %p229
      %p231 = scmp.ne.s32.totalorder %s223, %s226
      %p232 = scmp.eq.s32.totalorder %s19, 0
      %p233 = por %p231, %p232
      %p234 = scmp.ne.s32.totalorder %s223, %s226
      %p235 = scmp.eq.s32.totalorder %s24, 1
      %p236 = por %p234, %p235
      %p237 = scmp.ne.s32.totalorder %s226, %s227
      %p238 = scmp.eq.s32.totalorder %s24, 0
      %p239 = por %p237, %p238
      %p240 = scmp.ne.s32.totalorder %s226, %s227
      %p241 = scmp.eq.s32.totalorder %s25, 1
      %p242 = por %p240, %p241
      %p244 = scmp.ne.s32.totalorder %s227, %s243
      %p245 = scmp.eq.s32.totalorder %s25, 0
      %p246 = por %p244, %p245
      %p247 = scmp.le.s32.totalorder 1, %s19
      %p248 = scmp.lt.s32.totalorder %s19, 3
      %p249 = pnand %p247, %p248
      %p250 = pneg %p249
      // Predicated region
      $region9: #{net_forward.1} parent=5 // pred_check
        _
      $region10: #{net_forward.1} parent=5 // pred_check_branch
        %252 = sbr.rel (%p249) target = $region12
      $region11: #{net_forward.1} parent=5 // pred_region
        %s253 = ssub.s32 %s19, 1
        // Predicated region
        $region13: #{net_forward.1} parent=11 // pred_check
          %p254 = pneg %p66
        $region14: #{net_forward.1} parent=11 // pred_check_branch
          %256 = sbr.rel (%p254) target = $region16
        $region15: #{net_forward.1} parent=11 // pred_region
          _
        $region16: #{net_forward.1} parent=11 // pred_fallthru
          _
        // Predicated region
        $region17: #{net_forward.1} parent=11 // pred_check
          %p257 = pneg %p87
        $region18: #{net_forward.1} parent=11 // pred_check_branch
          %259 = sbr.rel (%p257) target = $region20
        $region19: #{net_forward.1} parent=11 // pred_region
          _
        $region20: #{net_forward.1} parent=11 // pred_fallthru
          _
        // Predicated region
        $region21: #{net_forward.1} parent=11 // pred_check
          %p260 = pneg %p108
        $region22: #{net_forward.1} parent=11 // pred_check_branch
          %262 = sbr.rel (%p260) target = $region24
        $region23: #{net_forward.1} parent=11 // pred_region
          %s264 = ssub.s32 8192, 8192
          %265 = vsyncadd [#allocation5], %s264
          %s266 = sshll.u32 [#allocation4], 4
          %s267 = int_to_ptr.vmem [resolvable:$true] %s266
          %272 = dma.hbm_to_vmem [thread:$0]  %s3, 8192, %s267, [#allocation5], 128, 128, 8
        $region24: #{net_forward.1} parent=11 // pred_fallthru
          _
        // Predicated region
        $region25: #{net_forward.1} parent=11 // pred_check
          %p273 = pneg %p129
        $region26: #{net_forward.1} parent=11 // pred_check_branch
          %275 = sbr.rel (%p273) target = $region28
        $region27: #{net_forward.1} parent=11 // pred_region
          _
        $region28: #{net_forward.1} parent=11 // pred_fallthru
          _
        // Predicated region
        $region29: #{net_forward.1} parent=11 // pred_check
          %p276 = pneg %p150
        $region30: #{net_forward.1} parent=11 // pred_check_branch
          %278 = sbr.rel (%p276) target = $region32
        $region31: #{net_forward.1} parent=11 // pred_region
          _
        $region32: #{net_forward.1} parent=11 // pred_fallthru
          _
        // Predicated region
        $region33: #{net_forward.1} parent=11 // pred_check
          %p279 = pneg %p171
        $region34: #{net_forward.1} parent=11 // pred_check_branch
          %281 = sbr.rel (%p279) target = $region36
        $region35: #{net_forward.1} parent=11 // pred_region
          _
        $region36: #{net_forward.1} parent=11 // pred_fallthru
          _
        // Predicated region
        $region37: #{net_forward.1} parent=11 // pred_check
          %p282 = pneg %p192
        $region38: #{net_forward.1} parent=11 // pred_check_branch
          %284 = sbr.rel (%p282) target = $region40
        $region39: #{net_forward.1} parent=11 // pred_region
          _
        $region40: #{net_forward.1} parent=11 // pred_fallthru
          _
        // Predicated region
        $region41: #{net_forward.1} parent=11 // pred_check
          %p285 = pneg %p213
        $region42: #{net_forward.1} parent=11 // pred_check_branch
          %287 = sbr.rel (%p285) target = $region44
        $region43: #{net_forward.1} parent=11 // pred_region
          _
        $region44: #{net_forward.1} parent=11 // pred_fallthru
          _
      $region12: #{net_forward.1} parent=5 // pred_fallthru
        _
      %p288 = scmp.lt.s32.totalorder %s19, 2
      // Predicated region
      $region45: #{net_forward.1} parent=5 // pred_check
        %p289 = pneg %p288
      $region46: #{net_forward.1} parent=5 // pred_check_branch
        %291 = sbr.rel (%p289) target = $region48
      $region47: #{net_forward.1} parent=5 // pred_region
        // Predicated region
        $region49: #{net_forward.1} parent=47 // pred_check
          %p292 = pneg %p39
        $region50: #{net_forward.1} parent=47 // pred_check_branch
          %294 = sbr.rel (%p292) target = $region52
        $region51: #{net_forward.1} parent=47 // pred_region
          %s295 = sand.u32 %s29, 1
          %s296 = scalar_lea.sflag [#allocation3], %s295
          %s297 = sand.u32 %s29, 1
          %s298 = smul.addr %s297, 32
          %s299 = scalar_lea.vmem [#allocation2], %s298
          %s300 = smul.u32 4, %s19
          %s302 = ssub.s32 512, 512
          %303 = vsyncadd %s296, %s302
          %s304 = smul.addr %s300, 128
          %s305 = scalar_lea.hbm %s0, %s304
          %s306 = sshll.u32 %s299, 4
          %s307 = int_to_ptr.vmem [resolvable:$true] %s306
          %312 = dma.hbm_to_vmem [thread:$0]  %s305, 512, %s307, %s296, 128, 128, 8
        $region52: #{net_forward.1} parent=47 // pred_fallthru
          _
      $region48: #{net_forward.1} parent=5 // pred_fallthru
        _
      %p313 = scmp.le.s32.totalorder 1, %s19
      %p314 = scmp.lt.s32.totalorder %s19, 3
      %p315 = pnand %p313, %p314
      %p316 = pneg %p315
      // Predicated region
      $region53: #{net_forward.1} parent=5 // pred_check
        _
      $region54: #{net_forward.1} parent=5 // pred_check_branch
        %318 = sbr.rel (%p315) target = $region56
      $region55: #{net_forward.1} parent=5 // pred_region
        %s319 = ssub.s32 %s19, 1
        %s320 = sand.u32 %s32, 1
        %s321 = scalar_lea.sflag [#allocation3], %s320
        %s322 = sand.u32 %s32, 1
        %s323 = smul.addr %s322, 32
        %s324 = scalar_lea.vmem [#allocation2], %s323
        // Predicated region
        $region57: #{net_forward.1} parent=55 // pred_check
          %p325 = pneg %p45
        $region58: #{net_forward.1} parent=55 // pred_check_branch
          %327 = sbr.rel (%p325) target = $region60
        $region59: #{net_forward.1} parent=55 // pred_region
          %328 = dma.done %s321, 512
        $region60: #{net_forward.1} parent=55 // pred_fallthru
          _
        // Predicated region
        $region61: #{net_forward.1} parent=55 // pred_check
          %p329 = pneg %p108
        $region62: #{net_forward.1} parent=55 // pred_check_branch
          %331 = sbr.rel (%p329) target = $region64
        $region63: #{net_forward.1} parent=55 // pred_region
          %332 = dma.done [#allocation5], 8192
        $region64: #{net_forward.1} parent=55 // pred_fallthru
          _
        %s333 = sand.u32 %s32, 1
        %s334 = scalar_lea.sflag [#allocation3], %s333
        %s335 = sand.u32 %s32, 1
        %s336 = smul.addr %s335, 32
        %s337 = scalar_lea.vmem [#allocation2], %s336
        %p338 = pneg %p45
        %p339 = pneg %p42
        %p340 = pneg %p66
        %p341 = pneg %p63
        %p342 = pneg %p87
        %p343 = pneg %p84
        %p344 = pneg %p108
        %p345 = pneg %p105
        %p346 = pneg %p129
        %p347 = pneg %p126
        %p348 = pneg %p150
        %p349 = pneg %p147
        %p350 = pneg %p171
        %p351 = pneg %p168
        %p352 = pneg %p192
        %p353 = pneg %p189
        %p354 = pneg %p213
        %p355 = pneg %p210
        %p356 = pneg %p239
        %p357 = pneg %p236
        %s358 = smul.u32 4, %s24
        %p359 = scmp.lt.s32.totalorder %s358, 7
        %s360 = scalar_select %p359, %s358, 7
        %s361 = smul.addr %s360, 8
        %s362 = scalar_lea.vmem %s9, %s361
        %s363 = smul.u32 4, %s24
        %s364 = smul.u32 4, %s24
        %p365 = scmp.lt.s32.totalorder %s364, 7
        %s366 = scalar_select %p365, %s364, 7
        %s367 = smul.addr %s366, 8
        %s368 = scalar_lea.vmem %s9, %s367
        %s369 = smul.u32 4, %s24
        %v371 = vld [vmem:[%s324] sm:$0xff]
        %v372 = vld [vmem:[%s324 + $0x8] sm:$0xff]
        %v373 = vld [vmem:[%s324 + $0x10] sm:$0xff]
        %v374 = vld [vmem:[%s324 + $0x18] sm:$0xff]
        %v375 = vpack.c.bf16 %v372, %v371
        %v376 = vpack.c.bf16 %v374, %v373
        %v377 = vld [vmem:[%s1] sm:$0xff]
        %v378 = vld [vmem:[%s1 + $0x8] sm:$0xff]
        %v379 = vld [vmem:[%s1 + $0x10] sm:$0xff]
        %v380 = vld [vmem:[%s1 + $0x18] sm:$0xff]
        %v381 = vld [vmem:[%s1 + $0x20] sm:$0xff]
        %v382 = vld [vmem:[%s1 + $0x28] sm:$0xff]
        %v383 = vld [vmem:[%s1 + $0x30] sm:$0xff]
        %v384 = vld [vmem:[%s1 + $0x38] sm:$0xff]
        %v385 = vld [vmem:[%s1 + $0x40] sm:$0xff]
        %v386 = vld [vmem:[%s1 + $0x48] sm:$0xff]
        %v387 = vld [vmem:[%s1 + $0x50] sm:$0xff]
        %v388 = vld [vmem:[%s1 + $0x58] sm:$0xff]
        %v389 = vld [vmem:[%s1 + $0x60] sm:$0xff]
        %v390 = vld [vmem:[%s1 + $0x68] sm:$0xff]
        %v391 = vld [vmem:[%s1 + $0x70] sm:$0xff]
        %v392 = vld [vmem:[%s1 + $0x78] sm:$0xff]
        %v393 = vld [vmem:[%s2] sm:$0xf]
        %v395 = vlaneseq
        %v396 = vshrl.u32 %v395, 7
        %v397 = vsub.s32 0, %v396
        %v398 = vrot.slane %v393, %v397
        %v399 = vlaneseq
        %v400 = vshrl.u32 %v399, 7
        %v401 = vsub.s32 1, %v400
        %v402 = vrot.slane %v393, %v401
        %v403 = vlaneseq
        %v404 = vshrl.u32 %v403, 7
        %v405 = vsub.s32 2, %v404
        %v406 = vrot.slane %v393, %v405
        %v407 = vlaneseq
        %v408 = vshrl.u32 %v407, 7
        %v409 = vsub.s32 3, %v408
        %v410 = vrot.slane %v393, %v409
        %v431 = vunpack.c.l.b16 %v377
        %v432 = vunpack.c.h.b16 %v377
        %v433 = vunpack.c.l.b16 %v378
        %v434 = vunpack.c.h.b16 %v378
        %v435 = vunpack.c.l.b16 %v379
        %v436 = vunpack.c.h.b16 %v379
        %v437 = vunpack.c.l.b16 %v380
        %v438 = vunpack.c.h.b16 %v380
        %v439 = vunpack.c.l.b16 %v381
        %v440 = vunpack.c.h.b16 %v381
        %v441 = vunpack.c.l.b16 %v382
        %v442 = vunpack.c.h.b16 %v382
        %v443 = vunpack.c.l.b16 %v383
        %v444 = vunpack.c.h.b16 %v383
        %v445 = vunpack.c.l.b16 %v384
        %v446 = vunpack.c.h.b16 %v384
        %v447 = vunpack.c.l.b16 %v385
        %v448 = vunpack.c.h.b16 %v385
        %v449 = vunpack.c.l.b16 %v386
        %v450 = vunpack.c.h.b16 %v386
        %v451 = vunpack.c.l.b16 %v387
        %v452 = vunpack.c.h.b16 %v387
        %v453 = vunpack.c.l.b16 %v388
        %v454 = vunpack.c.h.b16 %v388
        %v455 = vunpack.c.l.b16 %v389
        %v456 = vunpack.c.h.b16 %v389
        %v457 = vunpack.c.l.b16 %v390
        %v458 = vunpack.c.h.b16 %v390
        %v459 = vunpack.c.l.b16 %v391
        %v460 = vunpack.c.h.b16 %v391
        %v461 = vunpack.c.l.b16 %v392
        %v462 = vunpack.c.h.b16 %v392
        %v463 = vpack.c.b16 %v435, %v431
        %v464 = vpack.c.b16 %v436, %v432
        %v465 = vpack.c.b16 %v437, %v433
        %v466 = vpack.c.b16 %v438, %v434
        %v467 = vpack.c.b16 %v443, %v439
        %v468 = vpack.c.b16 %v444, %v440
        %v469 = vpack.c.b16 %v445, %v441
        %v470 = vpack.c.b16 %v446, %v442
        %v471 = vpack.c.b16 %v451, %v447
        %v472 = vpack.c.b16 %v452, %v448
        %v473 = vpack.c.b16 %v453, %v449
        %v474 = vpack.c.b16 %v454, %v450
        %v475 = vpack.c.b16 %v459, %v455
        %v476 = vpack.c.b16 %v460, %v456
        %v477 = vpack.c.b16 %v461, %v457
        %v478 = vpack.c.b16 %v462, %v458
        %vm495 = vcmask 523264
        %v497 = vsel %vm495, %v375, 0
        %v500 = vsel %vm495, %v376, 0
        %502 = vmatprep.subr.bf16.mxu0 %v464
        %503 = vmatpush1.bf16.msra.mxu0 %v463
        %504 = vmatprep.subr.bf16.mxu0 %v468
        %505 = vmatpush1.bf16.msra.mxu0 %v467
        %506 = vmatprep.subr.bf16.mxu0 %v472
        %507 = vmatpush1.bf16.msra.mxu0 %v471
        %508 = vmatprep.subr.bf16.mxu0 %v476
        %509 = vmatpush1.bf16.msra.mxu0 %v475
        %510 = vmatprep.subr.bf16.mxu0 0
        %511 = vmatpush1.bf16.msra.mxu0 0
        %512 = vmatprep.subr.bf16.mxu0 0
        %513 = vmatpush1.bf16.msra.mxu0 0
        %514 = vmatprep.subr.bf16.mxu0 0
        %515 = vmatpush1.bf16.msra.mxu0 0
        %516 = vmatprep.subr.bf16.mxu0 0
        %517 = vmatpush1.bf16.msra.mxu0 0
        %518 = vmatprep.subr.bf16.mxu0 0
        %519 = vmatpush1.bf16.msra.mxu0 0
        %520 = vmatprep.subr.bf16.mxu0 0
        %521 = vmatpush1.bf16.msra.mxu0 0
        %522 = vmatprep.subr.bf16.mxu0 0
        %523 = vmatpush1.bf16.msra.mxu0 0
        %524 = vmatprep.subr.bf16.mxu0 0
        %525 = vmatpush1.bf16.msra.mxu0 0
        %526 = vmatprep.subr.bf16.mxu0 0
        %527 = vmatpush1.bf16.msra.mxu0 0
        %528 = vmatprep.subr.bf16.mxu0 0
        %529 = vmatpush1.bf16.msra.mxu0 0
        %530 = vmatprep.subr.bf16.mxu0 0
        %531 = vmatpush1.bf16.msra.mxu0 0
        %532 = vmatprep.subr.bf16.mxu0 0
        %533 = vmatpush1.bf16.msra.mxu0 0
        %534 = vmatprep.mubr.bf16.mxu0 0
        %535 = vmatmul.mubr.bf16.gmra.mrb[0].mxu0 %v497
        %v536 = vpop.f32.mrb[0].mxu0
        %v537 = vadd.f32 %v398, %v536
        %v538 = vpop.f32.mrb[0].mxu0
        %v539 = vadd.f32 %v402, %v538
        %v540 = vpop.f32.mrb[0].mxu0
        %v541 = vadd.f32 %v398, %v540
        %v542 = vpop.f32.mrb[0].mxu0
        %v543 = vadd.f32 %v402, %v542
        %544 = vmatprep.mubr.bf16.mxu0 0
        %545 = vmatmul.mubr.bf16.gmra.mrb[0].mxu0 %v500
        %v546 = vpop.f32.mrb[0].mxu0
        %v547 = vadd.f32 %v398, %v546
        %v548 = vpop.f32.mrb[0].mxu0
        %v549 = vadd.f32 %v402, %v548
        %v550 = vpop.f32.mrb[0].mxu0
        %v551 = vadd.f32 %v398, %v550
        %v552 = vpop.f32.mrb[0].mxu0
        %v553 = vadd.f32 %v402, %v552
        %554 = vdwg.mxu0
        %555 = vmatprep.subr.bf16.mxu0 %v466
        %556 = vmatpush1.bf16.msra.mxu0 %v465
        %557 = vmatprep.subr.bf16.mxu0 %v470
        %558 = vmatpush1.bf16.msra.mxu0 %v469
        %559 = vmatprep.subr.bf16.mxu0 %v474
        %560 = vmatpush1.bf16.msra.mxu0 %v473
        %561 = vmatprep.subr.bf16.mxu0 %v478
        %562 = vmatpush1.bf16.msra.mxu0 %v477
        %563 = vmatprep.subr.bf16.mxu0 0
        %564 = vmatpush1.bf16.msra.mxu0 0
        %565 = vmatprep.subr.bf16.mxu0 0
        %566 = vmatpush1.bf16.msra.mxu0 0
        %567 = vmatprep.subr.bf16.mxu0 0
        %568 = vmatpush1.bf16.msra.mxu0 0
        %569 = vmatprep.subr.bf16.mxu0 0
        %570 = vmatpush1.bf16.msra.mxu0 0
        %571 = vmatprep.subr.bf16.mxu0 0
        %572 = vmatpush1.bf16.msra.mxu0 0
        %573 = vmatprep.subr.bf16.mxu0 0
        %574 = vmatpush1.bf16.msra.mxu0 0
        %575 = vmatprep.subr.bf16.mxu0 0
        %576 = vmatpush1.bf16.msra.mxu0 0
        %577 = vmatprep.subr.bf16.mxu0 0
        %578 = vmatpush1.bf16.msra.mxu0 0
        %579 = vmatprep.subr.bf16.mxu0 0
        %580 = vmatpush1.bf16.msra.mxu0 0
        %581 = vmatprep.subr.bf16.mxu0 0
        %582 = vmatpush1.bf16.msra.mxu0 0
        %583 = vmatprep.subr.bf16.mxu0 0
        %584 = vmatpush1.bf16.msra.mxu0 0
        %585 = vmatprep.subr.bf16.mxu0 0
        %586 = vmatpush1.bf16.msra.mxu0 0
        %587 = vmatprep.mubr.bf16.mxu0 0
        %588 = vmatmul.mubr.bf16.gmra.mrb[0].mxu0 %v497
        %v589 = vpop.f32.mrb[0].mxu0
        %v590 = vadd.f32 %v406, %v589
        %v591 = vpop.f32.mrb[0].mxu0
        %v592 = vadd.f32 %v410, %v591
        %v593 = vpop.f32.mrb[0].mxu0
        %v594 = vadd.f32 %v406, %v593
        %v595 = vpop.f32.mrb[0].mxu0
        %v596 = vadd.f32 %v410, %v595
        %597 = vmatprep.mubr.bf16.mxu0 0
        %598 = vmatmul.mubr.bf16.gmra.mrb[0].mxu0 %v500
        %v599 = vpop.f32.mrb[0].mxu0
        %v600 = vadd.f32 %v406, %v599
        %v601 = vpop.f32.mrb[0].mxu0
        %v602 = vadd.f32 %v410, %v601
        %v603 = vpop.f32.mrb[0].mxu0
        %v604 = vadd.f32 %v406, %v603
        %v605 = vpop.f32.mrb[0].mxu0
        %v606 = vadd.f32 %v410, %v605
        %607 = vdwg.mxu0
        %v608 = vmax.f32 %v537, 0.0
        %v609 = vmax.f32 %v539, 0.0
        %v610 = vmax.f32 %v590, 0.0
        %v611 = vmax.f32 %v592, 0.0
        %v612 = vmax.f32 %v541, 0.0
        %v613 = vmax.f32 %v543, 0.0
        %v614 = vmax.f32 %v594, 0.0
        %v615 = vmax.f32 %v596, 0.0
        %v616 = vmax.f32 %v547, 0.0
        %v617 = vmax.f32 %v549, 0.0
        %v618 = vmax.f32 %v600, 0.0
        %v619 = vmax.f32 %v602, 0.0
        %v620 = vmax.f32 %v551, 0.0
        %v621 = vmax.f32 %v553, 0.0
        %v622 = vmax.f32 %v604, 0.0
        %v623 = vmax.f32 %v606, 0.0
        %v624 = vpack.c.bf16 %v612, %v608
        %v625 = vpack.c.bf16 %v613, %v609
        %v626 = vpack.c.bf16 %v614, %v610
        %v627 = vpack.c.bf16 %v615, %v611
        %v628 = vpack.c.bf16 %v620, %v616
        %v629 = vpack.c.bf16 %v621, %v617
        %v630 = vpack.c.bf16 %v622, %v618
        %v631 = vpack.c.bf16 %v623, %v619
        %v632 = vld [vmem:[#allocation4] sm:$0xff]
        %v633 = vld [vmem:[#allocation4 + $0x8] sm:$0xff]
        %v634 = vld [vmem:[#allocation4 + $0x10] sm:$0xff]
        %v635 = vld [vmem:[#allocation4 + $0x18] sm:$0xff]
        %v636 = vld [vmem:[#allocation4 + $0x20] sm:$0xff]
        %v637 = vld [vmem:[#allocation4 + $0x28] sm:$0xff]
        %v638 = vld [vmem:[#allocation4 + $0x30] sm:$0xff]
        %v639 = vld [vmem:[#allocation4 + $0x38] sm:$0xff]
        %v640 = vld [vmem:[#allocation4 + $0x40] sm:$0xff]
        %v641 = vld [vmem:[#allocation4 + $0x48] sm:$0xff]
        %v642 = vld [vmem:[#allocation4 + $0x50] sm:$0xff]
        %v643 = vld [vmem:[#allocation4 + $0x58] sm:$0xff]
        %v644 = vld [vmem:[#allocation4 + $0x60] sm:$0xff]
        %v645 = vld [vmem:[#allocation4 + $0x68] sm:$0xff]
        %v646 = vld [vmem:[#allocation4 + $0x70] sm:$0xff]
        %v647 = vld [vmem:[#allocation4 + $0x78] sm:$0xff]
        %v648 = vld [vmem:[#allocation4 + $0x80] sm:$0xff]
        %v649 = vld [vmem:[#allocation4 + $0x88] sm:$0xff]
        %v650 = vld [vmem:[#allocation4 + $0x90] sm:$0xff]
        %v651 = vld [vmem:[#allocation4 + $0x98] sm:$0xff]
        %v652 = vld [vmem:[#allocation4 + $0xa0] sm:$0xff]
        %v653 = vld [vmem:[#allocation4 + $0xa8] sm:$0xff]
        %v654 = vld [vmem:[#allocation4 + $0xb0] sm:$0xff]
        %v655 = vld [vmem:[#allocation4 + $0xb8] sm:$0xff]
        %v656 = vld [vmem:[#allocation4 + $0xc0] sm:$0xff]
        %v657 = vld [vmem:[#allocation4 + $0xc8] sm:$0xff]
        %v658 = vld [vmem:[#allocation4 + $0xd0] sm:$0xff]
        %v659 = vld [vmem:[#allocation4 + $0xd8] sm:$0xff]
        %v660 = vld [vmem:[#allocation4 + $0xe0] sm:$0xff]
        %v661 = vld [vmem:[#allocation4 + $0xe8] sm:$0xff]
        %v662 = vld [vmem:[#allocation4 + $0xf0] sm:$0xff]
        %v663 = vld [vmem:[#allocation4 + $0xf8] sm:$0xff]
        %v664 = vld [vmem:[#allocation4 + $0x100] sm:$0xff]
        %v665 = vld [vmem:[#allocation4 + $0x108] sm:$0xff]
        %v666 = vld [vmem:[#allocation4 + $0x110] sm:$0xff]
        %v667 = vld [vmem:[#allocation4 + $0x118] sm:$0xff]
        %v668 = vld [vmem:[#allocation4 + $0x120] sm:$0xff]
        %v669 = vld [vmem:[#allocation4 + $0x128] sm:$0xff]
        %v670 = vld [vmem:[#allocation4 + $0x130] sm:$0xff]
        %v671 = vld [vmem:[#allocation4 + $0x138] sm:$0xff]
        %v672 = vld [vmem:[#allocation4 + $0x140] sm:$0xff]
        %v673 = vld [vmem:[#allocation4 + $0x148] sm:$0xff]
        %v674 = vld [vmem:[#allocation4 + $0x150] sm:$0xff]
        %v675 = vld [vmem:[#allocation4 + $0x158] sm:$0xff]
        %v676 = vld [vmem:[#allocation4 + $0x160] sm:$0xff]
        %v677 = vld [vmem:[#allocation4 + $0x168] sm:$0xff]
        %v678 = vld [vmem:[#allocation4 + $0x170] sm:$0xff]
        %v679 = vld [vmem:[#allocation4 + $0x178] sm:$0xff]
        %v680 = vld [vmem:[#allocation4 + $0x180] sm:$0xff]
        %v681 = vld [vmem:[#allocation4 + $0x188] sm:$0xff]
        %v682 = vld [vmem:[#allocation4 + $0x190] sm:$0xff]
        %v683 = vld [vmem:[#allocation4 + $0x198] sm:$0xff]
        %v684 = vld [vmem:[#allocation4 + $0x1a0] sm:$0xff]
        %v685 = vld [vmem:[#allocation4 + $0x1a8] sm:$0xff]
        %v686 = vld [vmem:[#allocation4 + $0x1b0] sm:$0xff]
        %v687 = vld [vmem:[#allocation4 + $0x1b8] sm:$0xff]
        %v688 = vld [vmem:[#allocation4 + $0x1c0] sm:$0xff]
        %v689 = vld [vmem:[#allocation4 + $0x1c8] sm:$0xff]
        %v690 = vld [vmem:[#allocation4 + $0x1d0] sm:$0xff]
        %v691 = vld [vmem:[#allocation4 + $0x1d8] sm:$0xff]
        %v692 = vld [vmem:[#allocation4 + $0x1e0] sm:$0xff]
        %v693 = vld [vmem:[#allocation4 + $0x1e8] sm:$0xff]
        %v694 = vld [vmem:[#allocation4 + $0x1f0] sm:$0xff]
        %v695 = vld [vmem:[#allocation4 + $0x1f8] sm:$0xff]
        %v696 = vld [vmem:[%s4] sm:$0x3]
        %v698 = vlaneseq
        %v699 = vshrl.u32 %v698, 7
        %v700 = vsub.s32 0, %v699
        %v701 = vrot.slane %v696, %v700
        %v702 = vlaneseq
        %v703 = vshrl.u32 %v702, 7
        %v704 = vsub.s32 1, %v703
        %v705 = vrot.slane %v696, %v704
        %v772 = vunpack.c.l.b16 %v632
        %v773 = vunpack.c.h.b16 %v632
        %v774 = vunpack.c.l.b16 %v633
        %v775 = vunpack.c.h.b16 %v633
        %v776 = vunpack.c.l.b16 %v634
        %v777 = vunpack.c.h.b16 %v634
        %v778 = vunpack.c.l.b16 %v635
        %v779 = vunpack.c.h.b16 %v635
        %v780 = vunpack.c.l.b16 %v636
        %v781 = vunpack.c.h.b16 %v636
        %v782 = vunpack.c.l.b16 %v637
        %v783 = vunpack.c.h.b16 %v637
        %v784 = vunpack.c.l.b16 %v638
        %v785 = vunpack.c.h.b16 %v638
        %v786 = vunpack.c.l.b16 %v639
        %v787 = vunpack.c.h.b16 %v639
        %v788 = vunpack.c.l.b16 %v640
        %v789 = vunpack.c.h.b16 %v640
        %v790 = vunpack.c.l.b16 %v641
        %v791 = vunpack.c.h.b16 %v641
        %v792 = vunpack.c.l.b16 %v642
        %v793 = vunpack.c.h.b16 %v642
        %v794 = vunpack.c.l.b16 %v643
        %v795 = vunpack.c.h.b16 %v643
        %v796 = vunpack.c.l.b16 %v644
        %v797 = vunpack.c.h.b16 %v644
        %v798 = vunpack.c.l.b16 %v645
        %v799 = vunpack.c.h.b16 %v645
        %v800 = vunpack.c.l.b16 %v646
        %v801 = vunpack.c.h.b16 %v646
        %v802 = vunpack.c.l.b16 %v647
        %v803 = vunpack.c.h.b16 %v647
        %v804 = vunpack.c.l.b16 %v648
        %v805 = vunpack.c.h.b16 %v648
        %v806 = vunpack.c.l.b16 %v649
        %v807 = vunpack.c.h.b16 %v649
        %v808 = vunpack.c.l.b16 %v650
        %v809 = vunpack.c.h.b16 %v650
        %v810 = vunpack.c.l.b16 %v651
        %v811 = vunpack.c.h.b16 %v651
        %v812 = vunpack.c.l.b16 %v652
        %v813 = vunpack.c.h.b16 %v652
        %v814 = vunpack.c.l.b16 %v653
        %v815 = vunpack.c.h.b16 %v653
        %v816 = vunpack.c.l.b16 %v654
        %v817 = vunpack.c.h.b16 %v654
        %v818 = vunpack.c.l.b16 %v655
        %v819 = vunpack.c.h.b16 %v655
        %v820 = vunpack.c.l.b16 %v656
        %v821 = vunpack.c.h.b16 %v656
        %v822 = vunpack.c.l.b16 %v657
        %v823 = vunpack.c.h.b16 %v657
        %v824 = vunpack.c.l.b16 %v658
        %v825 = vunpack.c.h.b16 %v658
        %v826 = vunpack.c.l.b16 %v659
        %v827 = vunpack.c.h.b16 %v659
        %v828 = vunpack.c.l.b16 %v660
        %v829 = vunpack.c.h.b16 %v660
        %v830 = vunpack.c.l.b16 %v661
        %v831 = vunpack.c.h.b16 %v661
        %v832 = vunpack.c.l.b16 %v662
        %v833 = vunpack.c.h.b16 %v662
        %v834 = vunpack.c.l.b16 %v663
        %v835 = vunpack.c.h.b16 %v663
        %v836 = vunpack.c.l.b16 %v664
        %v837 = vunpack.c.h.b16 %v664
        %v838 = vunpack.c.l.b16 %v665
        %v839 = vunpack.c.h.b16 %v665
        %v840 = vunpack.c.l.b16 %v666
        %v841 = vunpack.c.h.b16 %v666
        %v842 = vunpack.c.l.b16 %v667
        %v843 = vunpack.c.h.b16 %v667
        %v844 = vunpack.c.l.b16 %v668
        %v845 = vunpack.c.h.b16 %v668
        %v846 = vunpack.c.l.b16 %v669
        %v847 = vunpack.c.h.b16 %v669
        %v848 = vunpack.c.l.b16 %v670
        %v849 = vunpack.c.h.b16 %v670
        %v850 = vunpack.c.l.b16 %v671
        %v851 = vunpack.c.h.b16 %v671
        %v852 = vunpack.c.l.b16 %v672
        %v853 = vunpack.c.h.b16 %v672
        %v854 = vunpack.c.l.b16 %v673
        %v855 = vunpack.c.h.b16 %v673
        %v856 = vunpack.c.l.b16 %v674
        %v857 = vunpack.c.h.b16 %v674
        %v858 = vunpack.c.l.b16 %v675
        %v859 = vunpack.c.h.b16 %v675
        %v860 = vunpack.c.l.b16 %v676
        %v861 = vunpack.c.h.b16 %v676
        %v862 = vunpack.c.l.b16 %v677
        %v863 = vunpack.c.h.b16 %v677
        %v864 = vunpack.c.l.b16 %v678
        %v865 = vunpack.c.h.b16 %v678
        %v866 = vunpack.c.l.b16 %v679
        %v867 = vunpack.c.h.b16 %v679
        %v868 = vunpack.c.l.b16 %v680
        %v869 = vunpack.c.h.b16 %v680
        %v870 = vunpack.c.l.b16 %v681
        %v871 = vunpack.c.h.b16 %v681
        %v872 = vunpack.c.l.b16 %v682
        %v873 = vunpack.c.h.b16 %v682
        %v874 = vunpack.c.l.b16 %v683
        %v875 = vunpack.c.h.b16 %v683
        %v876 = vunpack.c.l.b16 %v684
        %v877 = vunpack.c.h.b16 %v684
        %v878 = vunpack.c.l.b16 %v685
        %v879 = vunpack.c.h.b16 %v685
        %v880 = vunpack.c.l.b16 %v686
        %v881 = vunpack.c.h.b16 %v686
        %v882 = vunpack.c.l.b16 %v687
        %v883 = vunpack.c.h.b16 %v687
        %v884 = vunpack.c.l.b16 %v688
        %v885 = vunpack.c.h.b16 %v688
        %v886 = vunpack.c.l.b16 %v689
        %v887 = vunpack.c.h.b16 %v689
        %v888 = vunpack.c.l.b16 %v690
        %v889 = vunpack.c.h.b16 %v690
        %v890 = vunpack.c.l.b16 %v691
        %v891 = vunpack.c.h.b16 %v691
        %v892 = vunpack.c.l.b16 %v692
        %v893 = vunpack.c.h.b16 %v692
        %v894 = vunpack.c.l.b16 %v693
        %v895 = vunpack.c.h.b16 %v693
        %v896 = vunpack.c.l.b16 %v694
        %v897 = vunpack.c.h.b16 %v694
        %v898 = vunpack.c.l.b16 %v695
        %v899 = vunpack.c.h.b16 %v695
        %v900 = vpack.c.b16 %v774, %v772
        %v901 = vpack.c.b16 %v775, %v773
        %v902 = vpack.c.b16 %v778, %v776
        %v903 = vpack.c.b16 %v779, %v777
        %v904 = vpack.c.b16 %v782, %v780
        %v905 = vpack.c.b16 %v783, %v781
        %v906 = vpack.c.b16 %v786, %v784
        %v907 = vpack.c.b16 %v787, %v785
        %v908 = vpack.c.b16 %v790, %v788
        %v909 = vpack.c.b16 %v791, %v789
        %v910 = vpack.c.b16 %v794, %v792
        %v911 = vpack.c.b16 %v795, %v793
        %v912 = vpack.c.b16 %v798, %v796
        %v913 = vpack.c.b16 %v799, %v797
        %v914 = vpack.c.b16 %v802, %v800
        %v915 = vpack.c.b16 %v803, %v801
        %v916 = vpack.c.b16 %v806, %v804
        %v917 = vpack.c.b16 %v807, %v805
        %v918 = vpack.c.b16 %v810, %v808
        %v919 = vpack.c.b16 %v811, %v809
        %v920 = vpack.c.b16 %v814, %v812
        %v921 = vpack.c.b16 %v815, %v813
        %v922 = vpack.c.b16 %v818, %v816
        %v923 = vpack.c.b16 %v819, %v817
        %v924 = vpack.c.b16 %v822, %v820
        %v925 = vpack.c.b16 %v823, %v821
        %v926 = vpack.c.b16 %v826, %v824
        %v927 = vpack.c.b16 %v827, %v825
        %v928 = vpack.c.b16 %v830, %v828
        %v929 = vpack.c.b16 %v831, %v829
        %v930 = vpack.c.b16 %v834, %v832
        %v931 = vpack.c.b16 %v835, %v833
        %v932 = vpack.c.b16 %v838, %v836
        %v933 = vpack.c.b16 %v839, %v837
        %v934 = vpack.c.b16 %v842, %v840
        %v935 = vpack.c.b16 %v843, %v841
        %v936 = vpack.c.b16 %v846, %v844
        %v937 = vpack.c.b16 %v847, %v845
        %v938 = vpack.c.b16 %v850, %v848
        %v939 = vpack.c.b16 %v851, %v849
        %v940 = vpack.c.b16 %v854, %v852
        %v941 = vpack.c.b16 %v855, %v853
        %v942 = vpack.c.b16 %v858, %v856
        %v943 = vpack.c.b16 %v859, %v857
        %v944 = vpack.c.b16 %v862, %v860
        %v945 = vpack.c.b16 %v863, %v861
        %v946 = vpack.c.b16 %v866, %v864
        %v947 = vpack.c.b16 %v867, %v865
        %v948 = vpack.c.b16 %v870, %v868
        %v949 = vpack.c.b16 %v871, %v869
        %v950 = vpack.c.b16 %v874, %v872
        %v951 = vpack.c.b16 %v875, %v873
        %v952 = vpack.c.b16 %v878, %v876
        %v953 = vpack.c.b16 %v879, %v877
        %v954 = vpack.c.b16 %v882, %v880
        %v955 = vpack.c.b16 %v883, %v881
        %v956 = vpack.c.b16 %v886, %v884
        %v957 = vpack.c.b16 %v887, %v885
        %v958 = vpack.c.b16 %v890, %v888
        %v959 = vpack.c.b16 %v891, %v889
        %v960 = vpack.c.b16 %v894, %v892
        %v961 = vpack.c.b16 %v895, %v893
        %v962 = vpack.c.b16 %v898, %v896
        %v963 = vpack.c.b16 %v899, %v897
        %1028 = vmatprep.subr.bf16.mxu0 %v901
        %1029 = vmatpush1.bf16.msra.mxu0 %v900
        %1030 = vmatprep.subr.bf16.mxu0 %v903
        %1031 = vmatpush1.bf16.msra.mxu0 %v902
        %1032 = vmatprep.subr.bf16.mxu0 %v905
        %1033 = vmatpush1.bf16.msra.mxu0 %v904
        %1034 = vmatprep.subr.bf16.mxu0 %v907
        %1035 = vmatpush1.bf16.msra.mxu0 %v906
        %1036 = vmatprep.subr.bf16.mxu0 %v909
        %1037 = vmatpush1.bf16.msra.mxu0 %v908
        %1038 = vmatprep.subr.bf16.mxu0 %v911
        %1039 = vmatpush1.bf16.msra.mxu0 %v910
        %1040 = vmatprep.subr.bf16.mxu0 %v913
        %1041 = vmatpush1.bf16.msra.mxu0 %v912
        %1042 = vmatprep.subr.bf16.mxu0 %v915
        %1043 = vmatpush1.bf16.msra.mxu0 %v914
        %1044 = vmatprep.subr.bf16.mxu0 %v917
        %1045 = vmatpush1.bf16.msra.mxu0 %v916
        %1046 = vmatprep.subr.bf16.mxu0 %v919
        %1047 = vmatpush1.bf16.msra.mxu0 %v918
        %1048 = vmatprep.subr.bf16.mxu0 %v921
        %1049 = vmatpush1.bf16.msra.mxu0 %v920
        %1050 = vmatprep.subr.bf16.mxu0 %v923
        %1051 = vmatpush1.bf16.msra.mxu0 %v922
        %1052 = vmatprep.subr.bf16.mxu0 %v925
        %1053 = vmatpush1.bf16.msra.mxu0 %v924
        %1054 = vmatprep.subr.bf16.mxu0 %v927
        %1055 = vmatpush1.bf16.msra.mxu0 %v926
        %1056 = vmatprep.subr.bf16.mxu0 %v929
        %1057 = vmatpush1.bf16.msra.mxu0 %v928
        %1058 = vmatprep.subr.bf16.mxu0 %v931
        %1059 = vmatpush1.bf16.msra.mxu0 %v930
        %1060 = vmatprep.mubr.bf16.mxu0 %v625
        %1061 = vmatmul.mubr.bf16.gmra.mrb[0].mxu0 %v624
        %v1062 = vpop.f32.mrb[0].mxu0
        %v1063 = vadd.f32 %v701, %v1062
        %v1064 = vpop.f32.mrb[0].mxu0
        %v1065 = vadd.f32 %v705, %v1064
        %v1066 = vpop.f32.mrb[0].mxu0
        %v1067 = vadd.f32 %v701, %v1066
        %v1068 = vpop.f32.mrb[0].mxu0
        %v1069 = vadd.f32 %v705, %v1068
        %1070 = vmatprep.mubr.bf16.mxu0 %v629
        %1071 = vmatmul.mubr.bf16.gmra.mrb[0].mxu0 %v628
        %v1072 = vpop.f32.mrb[0].mxu0
        %v1073 = vadd.f32 %v701, %v1072
        %v1074 = vpop.f32.mrb[0].mxu0
        %v1075 = vadd.f32 %v705, %v1074
        %v1076 = vpop.f32.mrb[0].mxu0
        %v1077 = vadd.f32 %v701, %v1076
        %v1078 = vpop.f32.mrb[0].mxu0
        %v1079 = vadd.f32 %v705, %v1078
        %1080 = vdwg.mxu0
        %1081 = vmatprep.subr.bf16.mxu0 %v933
        %1082 = vmatpush1.bf16.msra.mxu0 %v932
        %1083 = vmatprep.subr.bf16.mxu0 %v935
        %1084 = vmatpush1.bf16.msra.mxu0 %v934
        %1085 = vmatprep.subr.bf16.mxu0 %v937
        %1086 = vmatpush1.bf16.msra.mxu0 %v936
        %1087 = vmatprep.subr.bf16.mxu0 %v939
        %1088 = vmatpush1.bf16.msra.mxu0 %v938
        %1089 = vmatprep.subr.bf16.mxu0 %v941
        %1090 = vmatpush1.bf16.msra.mxu0 %v940
        %1091 = vmatprep.subr.bf16.mxu0 %v943
        %1092 = vmatpush1.bf16.msra.mxu0 %v942
        %1093 = vmatprep.subr.bf16.mxu0 %v945
        %1094 = vmatpush1.bf16.msra.mxu0 %v944
        %1095 = vmatprep.subr.bf16.mxu0 %v947
        %1096 = vmatpush1.bf16.msra.mxu0 %v946
        %1097 = vmatprep.subr.bf16.mxu0 %v949
        %1098 = vmatpush1.bf16.msra.mxu0 %v948
        %1099 = vmatprep.subr.bf16.mxu0 %v951
        %1100 = vmatpush1.bf16.msra.mxu0 %v950
        %1101 = vmatprep.subr.bf16.mxu0 %v953
        %1102 = vmatpush1.bf16.msra.mxu0 %v952
        %1103 = vmatprep.subr.bf16.mxu0 %v955
        %1104 = vmatpush1.bf16.msra.mxu0 %v954
        %1105 = vmatprep.subr.bf16.mxu0 %v957
        %1106 = vmatpush1.bf16.msra.mxu0 %v956
        %1107 = vmatprep.subr.bf16.mxu0 %v959
        %1108 = vmatpush1.bf16.msra.mxu0 %v958
        %1109 = vmatprep.subr.bf16.mxu0 %v961
        %1110 = vmatpush1.bf16.msra.mxu0 %v960
        %1111 = vmatprep.subr.bf16.mxu0 %v963
        %1112 = vmatpush1.bf16.msra.mxu0 %v962
        %1113 = vmatprep.mubr.bf16.mxu0 %v627
        %1114 = vmatmul.mubr.bf16.gmra.mrb[0].mxu0 %v626
        %v1115 = vpop.f32.mrb[0].mxu0
        %v1116 = vadd.f32 %v1063, %v1115
        %v1117 = vpop.f32.mrb[0].mxu0
        %v1118 = vadd.f32 %v1065, %v1117
        %v1119 = vpop.f32.mrb[0].mxu0
        %v1120 = vadd.f32 %v1067, %v1119
        %v1121 = vpop.f32.mrb[0].mxu0
        %v1122 = vadd.f32 %v1069, %v1121
        %1123 = vmatprep.mubr.bf16.mxu0 %v631
        %1124 = vmatmul.mubr.bf16.gmra.mrb[0].mxu0 %v630
        %v1125 = vpop.f32.mrb[0].mxu0
        %v1126 = vadd.f32 %v1073, %v1125
        %v1127 = vpop.f32.mrb[0].mxu0
        %v1128 = vadd.f32 %v1075, %v1127
        %v1129 = vpop.f32.mrb[0].mxu0
        %v1130 = vadd.f32 %v1077, %v1129
        %v1131 = vpop.f32.mrb[0].mxu0
        %v1132 = vadd.f32 %v1079, %v1131
        %1133 = vdwg.mxu0
        %v1134 = vmax.f32 %v1116, 0.0
        %v1135 = vmax.f32 %v1118, 0.0
        %v1136 = vmax.f32 %v1120, 0.0
        %v1137 = vmax.f32 %v1122, 0.0
        %v1138 = vmax.f32 %v1126, 0.0
        %v1139 = vmax.f32 %v1128, 0.0
        %v1140 = vmax.f32 %v1130, 0.0
        %v1141 = vmax.f32 %v1132, 0.0
        %v1142 = vpack.c.bf16 %v1136, %v1134
        %v1143 = vpack.c.bf16 %v1137, %v1135
        %v1144 = vpack.c.bf16 %v1140, %v1138
        %v1145 = vpack.c.bf16 %v1141, %v1139
        %v1146 = vld [vmem:[%s5] sm:$0xf]
        %v1147 = vld [vmem:[%s5 + $0x4] sm:$0xf]
        %v1148 = vld [vmem:[%s5 + $0x8] sm:$0xf]
        %v1149 = vld [vmem:[%s5 + $0xc] sm:$0xf]
        %v1150 = vld [vmem:[%s5 + $0x10] sm:$0xf]
        %v1151 = vld [vmem:[%s5 + $0x14] sm:$0xf]
        %v1152 = vld [vmem:[%s5 + $0x18] sm:$0xf]
        %v1153 = vld [vmem:[%s5 + $0x1c] sm:$0xf]
        %v1154 = vld [vmem:[%s5 + $0x20] sm:$0xf]
        %v1155 = vld [vmem:[%s5 + $0x24] sm:$0xf]
        %v1156 = vld [vmem:[%s5 + $0x28] sm:$0xf]
        %v1157 = vld [vmem:[%s5 + $0x2c] sm:$0xf]
        %v1158 = vld [vmem:[%s5 + $0x30] sm:$0xf]
        %v1159 = vld [vmem:[%s5 + $0x34] sm:$0xf]
        %v1160 = vld [vmem:[%s5 + $0x38] sm:$0xf]
        %v1161 = vld [vmem:[%s5 + $0x3c] sm:$0xf]
        %v1162 = vld [vmem:[%s5 + $0x40] sm:$0xf]
        %v1163 = vld [vmem:[%s5 + $0x44] sm:$0xf]
        %v1164 = vld [vmem:[%s5 + $0x48] sm:$0xf]
        %v1165 = vld [vmem:[%s5 + $0x4c] sm:$0xf]
        %v1166 = vld [vmem:[%s5 + $0x50] sm:$0xf]
        %v1167 = vld [vmem:[%s5 + $0x54] sm:$0xf]
        %v1168 = vld [vmem:[%s5 + $0x58] sm:$0xf]
        %v1169 = vld [vmem:[%s5 + $0x5c] sm:$0xf]
        %v1170 = vld [vmem:[%s5 + $0x60] sm:$0xf]
        %v1171 = vld [vmem:[%s5 + $0x64] sm:$0xf]
        %v1172 = vld [vmem:[%s5 + $0x68] sm:$0xf]
        %v1173 = vld [vmem:[%s5 + $0x6c] sm:$0xf]
        %v1174 = vld [vmem:[%s5 + $0x70] sm:$0xf]
        %v1175 = vld [vmem:[%s5 + $0x74] sm:$0xf]
        %v1176 = vld [vmem:[%s5 + $0x78] sm:$0xf]
        %v1177 = vld [vmem:[%s5 + $0x7c] sm:$0xf]
        %v1178 = vld [vmem:[%s6] sm:$0x1]
        %v1180 = vlaneseq
        %v1181 = vshrl.u32 %v1180, 7
        %v1182 = vsub.s32 0, %v1181
        %v1183 = vrot.slane %v1178, %v1182
        %v1217 = vunpack.c.l.b16 %v1146
        %v1218 = vunpack.c.l.b16 %v1147
        %v1219 = vunpack.c.l.b16 %v1148
        %v1220 = vunpack.c.l.b16 %v1149
        %v1221 = vunpack.c.l.b16 %v1150
        %v1222 = vunpack.c.l.b16 %v1151
        %v1223 = vunpack.c.l.b16 %v1152
        %v1224 = vunpack.c.l.b16 %v1153
        %v1225 = vunpack.c.l.b16 %v1154
        %v1226 = vunpack.c.l.b16 %v1155
        %v1227 = vunpack.c.l.b16 %v1156
        %v1228 = vunpack.c.l.b16 %v1157
        %v1229 = vunpack.c.l.b16 %v1158
        %v1230 = vunpack.c.l.b16 %v1159
        %v1231 = vunpack.c.l.b16 %v1160
        %v1232 = vunpack.c.l.b16 %v1161
        %v1233 = vunpack.c.l.b16 %v1162
        %v1234 = vunpack.c.l.b16 %v1163
        %v1235 = vunpack.c.l.b16 %v1164
        %v1236 = vunpack.c.l.b16 %v1165
        %v1237 = vunpack.c.l.b16 %v1166
        %v1238 = vunpack.c.l.b16 %v1167
        %v1239 = vunpack.c.l.b16 %v1168
        %v1240 = vunpack.c.l.b16 %v1169
        %v1241 = vunpack.c.l.b16 %v1170
        %v1242 = vunpack.c.l.b16 %v1171
        %v1243 = vunpack.c.l.b16 %v1172
        %v1244 = vunpack.c.l.b16 %v1173
        %v1245 = vunpack.c.l.b16 %v1174
        %v1246 = vunpack.c.l.b16 %v1175
        %v1247 = vunpack.c.l.b16 %v1176
        %v1248 = vunpack.c.l.b16 %v1177
        %v1249 = vpack.c.b16 %v1218, %v1217
        %v1250 = vpack.c.b16 %v1220, %v1219
        %v1251 = vpack.c.b16 %v1222, %v1221
        %v1252 = vpack.c.b16 %v1224, %v1223
        %v1253 = vpack.c.b16 %v1226, %v1225
        %v1254 = vpack.c.b16 %v1228, %v1227
        %v1255 = vpack.c.b16 %v1230, %v1229
        %v1256 = vpack.c.b16 %v1232, %v1231
        %v1257 = vpack.c.b16 %v1234, %v1233
        %v1258 = vpack.c.b16 %v1236, %v1235
        %v1259 = vpack.c.b16 %v1238, %v1237
        %v1260 = vpack.c.b16 %v1240, %v1239
        %v1261 = vpack.c.b16 %v1242, %v1241
        %v1262 = vpack.c.b16 %v1244, %v1243
        %v1263 = vpack.c.b16 %v1246, %v1245
        %v1264 = vpack.c.b16 %v1248, %v1247
        %1281 = vmatprep.subr.bf16.mxu0 0
        %1282 = vmatpush1.bf16.msra.mxu0 %v1249
        %1283 = vmatprep.subr.bf16.mxu0 0
        %1284 = vmatpush1.bf16.msra.mxu0 %v1250
        %1285 = vmatprep.subr.bf16.mxu0 0
        %1286 = vmatpush1.bf16.msra.mxu0 %v1251
        %1287 = vmatprep.subr.bf16.mxu0 0
        %1288 = vmatpush1.bf16.msra.mxu0 %v1252
        %1289 = vmatprep.subr.bf16.mxu0 0
        %1290 = vmatpush1.bf16.msra.mxu0 %v1253
        %1291 = vmatprep.subr.bf16.mxu0 0
        %1292 = vmatpush1.bf16.msra.mxu0 %v1254
        %1293 = vmatprep.subr.bf16.mxu0 0
        %1294 = vmatpush1.bf16.msra.mxu0 %v1255
        %1295 = vmatprep.subr.bf16.mxu0 0
        %1296 = vmatpush1.bf16.msra.mxu0 %v1256
        %1297 = vmatprep.subr.bf16.mxu0 0
        %1298 = vmatpush1.bf16.msra.mxu0 %v1257
        %1299 = vmatprep.subr.bf16.mxu0 0
        %1300 = vmatpush1.bf16.msra.mxu0 %v1258
        %1301 = vmatprep.subr.bf16.mxu0 0
        %1302 = vmatpush1.bf16.msra.mxu0 %v1259
        %1303 = vmatprep.subr.bf16.mxu0 0
        %1304 = vmatpush1.bf16.msra.mxu0 %v1260
        %1305 = vmatprep.subr.bf16.mxu0 0
        %1306 = vmatpush1.bf16.msra.mxu0 %v1261
        %1307 = vmatprep.subr.bf16.mxu0 0
        %1308 = vmatpush1.bf16.msra.mxu0 %v1262
        %1309 = vmatprep.subr.bf16.mxu0 0
        %1310 = vmatpush1.bf16.msra.mxu0 %v1263
        %1311 = vmatprep.subr.bf16.mxu0 0
        %1312 = vmatpush1.bf16.msra.mxu0 %v1264
        %1313 = vmatprep.mubr.bf16.mxu0 %v1143
        %1314 = vmatmul.mubr.bf16.gmra.mrb[0].mxu0 %v1142
        %v1315 = vpop.f32.mrb[0].mxu0
        %v1316 = vadd.f32 %v1183, %v1315
        %v1317 = vpop.f32.mrb[0].mxu0
        %v1318 = vpop.f32.mrb[0].mxu0
        %v1319 = vadd.f32 %v1183, %v1318
        %v1320 = vpop.f32.mrb[0].mxu0
        %1321 = vmatprep.mubr.bf16.mxu0 %v1145
        %1322 = vmatmul.mubr.bf16.gmra.mrb[0].mxu0 %v1144
        %v1323 = vpop.f32.mrb[0].mxu0
        %v1324 = vadd.f32 %v1183, %v1323
        %v1325 = vpop.f32.mrb[0].mxu0
        %v1326 = vpop.f32.mrb[0].mxu0
        %v1327 = vadd.f32 %v1183, %v1326
        %v1328 = vpop.f32.mrb[0].mxu0
        %1329 = vdwg.mxu0
        %v1330 = vmax.f32 %v1316, 0.0
        %v1331 = vmax.f32 %v1319, 0.0
        %v1332 = vmax.f32 %v1324, 0.0
        %v1333 = vmax.f32 %v1327, 0.0
        %v1334 = vpack.c.bf16 %v1331, %v1330
        %v1335 = vpack.c.bf16 %v1333, %v1332
        %v1336 = vld [vmem:[%s7] sm:$0xf]
        %v1337 = vld [vmem:[%s7 + $0x4] sm:$0xf]
        %v1338 = vld [vmem:[%s7 + $0x8] sm:$0xf]
        %v1339 = vld [vmem:[%s7 + $0xc] sm:$0xf]
        %v1340 = vld [vmem:[%s8] sm:$0x1]
        %v1342 = vlaneseq
        %v1343 = vshrl.u32 %v1342, 7
        %v1344 = vsub.s32 0, %v1343
        %v1345 = vrot.slane %v1340, %v1344
        %v1351 = vunpack.c.l.b16 %v1336
        %v1352 = vunpack.c.l.b16 %v1337
        %v1353 = vunpack.c.l.b16 %v1338
        %v1354 = vunpack.c.l.b16 %v1339
        %v1355 = vpack.c.b16 %v1352, %v1351
        %v1356 = vpack.c.b16 %v1354, %v1353
        %vm1359 = vcmask 261120
        %v1361 = vsel %vm1359, %v1334, 0
        %v1364 = vsel %vm1359, %v1335, 0
        %1366 = vmatprep.subr.bf16.mxu0 0
        %1367 = vmatpush1.bf16.msra.mxu0 %v1355
        %1368 = vmatprep.subr.bf16.mxu0 0
        %1369 = vmatpush1.bf16.msra.mxu0 %v1356
        %1370 = vmatprep.subr.bf16.mxu0 0
        %1371 = vmatpush1.bf16.msra.mxu0 0
        %1372 = vmatprep.subr.bf16.mxu0 0
        %1373 = vmatpush1.bf16.msra.mxu0 0
        %1374 = vmatprep.subr.bf16.mxu0 0
        %1375 = vmatpush1.bf16.msra.mxu0 0
        %1376 = vmatprep.subr.bf16.mxu0 0
        %1377 = vmatpush1.bf16.msra.mxu0 0
        %1378 = vmatprep.subr.bf16.mxu0 0
        %1379 = vmatpush1.bf16.msra.mxu0 0
        %1380 = vmatprep.subr.bf16.mxu0 0
        %1381 = vmatpush1.bf16.msra.mxu0 0
        %1382 = vmatprep.subr.bf16.mxu0 0
        %1383 = vmatpush1.bf16.msra.mxu0 0
        %1384 = vmatprep.subr.bf16.mxu0 0
        %1385 = vmatpush1.bf16.msra.mxu0 0
        %1386 = vmatprep.subr.bf16.mxu0 0
        %1387 = vmatpush1.bf16.msra.mxu0 0
        %1388 = vmatprep.subr.bf16.mxu0 0
        %1389 = vmatpush1.bf16.msra.mxu0 0
        %1390 = vmatprep.subr.bf16.mxu0 0
        %1391 = vmatpush1.bf16.msra.mxu0 0
        %1392 = vmatprep.subr.bf16.mxu0 0
        %1393 = vmatpush1.bf16.msra.mxu0 0
        %1394 = vmatprep.subr.bf16.mxu0 0
        %1395 = vmatpush1.bf16.msra.mxu0 0
        %1396 = vmatprep.subr.bf16.mxu0 0
        %1397 = vmatpush1.bf16.msra.mxu0 0
        %1398 = vmatprep.mubr.bf16.mxu0 0
        %1399 = vmatmul.mubr.bf16.gmra.mrb[0].mxu0 %v1361
        %v1400 = vpop.f32.mrb[0].mxu0
        %v1401 = vadd.f32 %v1345, %v1400
        %v1402 = vpop.f32.mrb[0].mxu0
        %v1403 = vpop.f32.mrb[0].mxu0
        %v1404 = vadd.f32 %v1345, %v1403
        %v1405 = vpop.f32.mrb[0].mxu0
        %1406 = vmatprep.mubr.bf16.mxu0 0
        %1407 = vmatmul.mubr.bf16.gmra.mrb[0].mxu0 %v1364
        %v1408 = vpop.f32.mrb[0].mxu0
        %v1409 = vadd.f32 %v1345, %v1408
        %v1410 = vpop.f32.mrb[0].mxu0
        %v1411 = vpop.f32.mrb[0].mxu0
        %v1412 = vadd.f32 %v1345, %v1411
        %v1413 = vpop.f32.mrb[0].mxu0
        %1414 = vdwg.mxu0
        %1415 = vmax.xlane.f32.xlu0 %v1401
        %v1416 = vpop.xlane.xlu0 %1415
        %1417 = vmax.xlane.f32.xlu0 %v1404
        %v1418 = vpop.xlane.xlu0 %1417
        %1419 = vmax.xlane.f32.xlu0 %v1409
        %v1420 = vpop.xlane.xlu0 %1419
        %1421 = vmax.xlane.f32.xlu0 %v1412
        %v1422 = vpop.xlane.xlu0 %1421
        %v1423 = vsub.f32 %v1401, %v1416
        %v1424 = vsub.f32 %v1404, %v1418
        %v1425 = vsub.f32 %v1409, %v1420
        %v1426 = vsub.f32 %v1412, %v1422
        %v1427 = vmul.f32 %v1423, 1.442695
        %v1428 = vpow.pop %v1427
        %v1429 = vmul.f32 %v1424, 1.442695
        %v1430 = vpow.pop %v1429
        %v1431 = vmul.f32 %v1425, 1.442695
        %v1432 = vpow.pop %v1431
        %v1433 = vmul.f32 %v1426, 1.442695
        %v1434 = vpow.pop %v1433
        %1435 = vadd.xlane.f32.xlu0 %v1428
        %v1436 = vpop.xlane.xlu0 %1435
        %1437 = vadd.xlane.f32.xlu0 %v1430
        %v1438 = vpop.xlane.xlu0 %1437
        %1439 = vadd.xlane.f32.xlu0 %v1432
        %v1440 = vpop.xlane.xlu0 %1439
        %1441 = vadd.xlane.f32.xlu0 %v1434
        %v1442 = vpop.xlane.xlu0 %1441
        %v1443 = vlog2.pop %v1436
        %v1444 = vmul.f32 %v1443, 0.6931472
        %v1445 = vlog2.pop %v1438
        %v1446 = vmul.f32 %v1445, 0.6931472
        %v1447 = vlog2.pop %v1440
        %v1448 = vmul.f32 %v1447, 0.6931472
        %v1449 = vlog2.pop %v1442
        %v1450 = vmul.f32 %v1449, 0.6931472
        %v1451 = vsub.f32 %v1423, %v1444
        %v1452 = vsub.f32 %v1424, %v1446
        %v1453 = vsub.f32 %v1425, %v1448
        %v1454 = vsub.f32 %v1426, %v1450
        %1455 = vst [vmem:[%s368] sm:$0xff] %v1451
        %1456 = vst [vmem:[%s368 + $0x8] sm:$0xff] %v1452
        %1457 = vst [vmem:[%s368 + $0x10] sm:$0xff] %v1453
        %1458 = vst [vmem:[%s368 + $0x18] sm:$0xff] %v1454
        %s1459 = smul.u32 4, %s24
        %p1460 = scmp.lt.s32.totalorder %s1459, 7
        %s1461 = scalar_select %p1460, %s1459, 7
        %s1462 = smul.addr %s1461, 8
        %s1463 = scalar_lea.vmem %s9, %s1462
        // Predicated region
        $region65: #{net_forward.1} parent=55 // pred_check
          %p1464 = pneg %p236
        $region66: #{net_forward.1} parent=55 // pred_check_branch
          %1466 = sbr.rel (%p1464) target = $region68
        $region67: #{net_forward.1} parent=55 // pred_region
          %s1467 = smul.u32 4, %s24
        $region68: #{net_forward.1} parent=55 // pred_fallthru
          _
      $region56: #{net_forward.1} parent=5 // pred_fallthru
        _
      %p1468 = scmp.le.s32.totalorder 2, %s19
      // Predicated region
      $region69: #{net_forward.1} parent=5 // pred_check
        %p1469 = pneg %p1468
      $region70: #{net_forward.1} parent=5 // pred_check_branch
        %1471 = sbr.rel (%p1469) target = $region72
      $region71: #{net_forward.1} parent=5 // pred_region
        %s1472 = ssub.s32 %s19, 2
        // Predicated region
        $region73: #{net_forward.1} parent=71 // pred_check
          %p1473 = pneg %p242
        $region74: #{net_forward.1} parent=71 // pred_check_branch
          %1475 = sbr.rel (%p1473) target = $region76
        $region75: #{net_forward.1} parent=71 // pred_region
          %s1476 = smul.u32 4, %s25
          %p1477 = scmp.lt.s32.totalorder %s1476, 7
          %s1478 = scalar_select %p1477, %s1476, 7
          %s1479 = smul.addr %s1478, 8
          %s1480 = scalar_lea.vmem %s9, %s1479
        $region76: #{net_forward.1} parent=71 // pred_fallthru
          _
      $region72: #{net_forward.1} parent=5 // pred_fallthru
        _
    $region6: #{net_forward.1} parent=1 // loop_footer
      %s23 = sadd.s32 1, %s19
    $region7: #{net_forward.1} parent=1 // loop_footer_branch
      %18 = sbr.rel target = $region3
    $region8: #{net_forward.1} parent=1 // loop_exit
      _
    %1481 = vsyncpa [#allocation3], 1
    %s1482 = scalar_lea.sflag [#allocation3], 1
    %1483 = vsyncpa %s1482, 1
    %1484 = vsyncpa [#allocation5], 1

</llo_original>
